<compile_context>
chip_gen: v6e
topology: v6e:2x2x1
jax: 0.10.0
libtpu: 0.0.40
codegen_flags: <defaults>
</compile_context>

<pallas_src>
import math

import jax
import jax.numpy as jnp
from jax.experimental import pallas as pl
from jax.experimental.pallas import tpu as pltpu


# ----------------------------- kernels ------------------------------------ #

def _mask_uncond_kernel(x_ref, mask_ref, o_ref):
    # mask_ref: (1, TN) slice of the learned parameter.
    one = jnp.ones((), dtype=x_ref.dtype)
    zero = jnp.zeros((), dtype=x_ref.dtype)
    binary_mask = jnp.where(mask_ref[...] > 0, one, zero)      # (1, TN), exact 0/1
    o_ref[...] = x_ref[...] * binary_mask                      # broadcast over rows


def _mask_cond_kernel(x_ref, cond_ref, wT_ref, b_ref, o_ref):
    # logits = cond @ W^T + b  -> (TB, TN), f32 accumulation on the MXU.
    logits = jnp.dot(cond_ref[...], wT_ref[...],
                     preferred_element_type=jnp.float32)
    logits = logits + b_ref[...].astype(jnp.float32)
    one = jnp.ones((), dtype=x_ref.dtype)
    zero = jnp.zeros((), dtype=x_ref.dtype)
    binary_mask = jnp.where(logits > 0, one, zero)              # (TB, TN)
    o_ref[...] = x_ref[...] * binary_mask


# --------------------------- tile selection -------------------------------- #

_DEFAULT_TILE_BYTES = 4 << 20   # ~4 MiB per x block => >= ~8 MiB HBM traffic / step


def _sublane_pack(dtype):
    # 8 for f32, 16 for bf16, 32 for int8/fp8.
    return max(8, 32 // jnp.dtype(dtype).itemsize)


def _pick_feature_tile(N):
    # Largest lane-dense tile (multiple of 128) that divides N; else full N
    # (a full-extent block is always legal regardless of divisibility).
    if N % 128 == 0:
        for tn in (2048, 1024, 512, 256, 128):
            if tn <= N and N % tn == 0:
                return tn
    return N


def _pick_batch_tile(B, TN, dtype, target_bytes):
    pack = _sublane_pack(dtype)
    itemsize = jnp.dtype(dtype).itemsize
    tb = (target_bytes // max(1, TN * itemsize)) // pack * pack
    tb = max(pack, tb)
    if tb >= B:
        return B          # full-dim block: legal even if B % pack != 0
    return tb


def _maybe_split_for_megacore(B, TB, N, TN, dtype):
    # Give v7x's second TensorCore something to do when the grid would be (1,1).
    pack = _sublane_pack(dtype)
    if pl.cdiv(B, TB) * pl.cdiv(N, TN) >= 2:
        return TB, TN
    if TB >= 2 * pack:
        half = -(-(TB // 2) // pack) * pack          # ceil(TB/2) to pack multiple
        return half, TN
    if TN >= 256 and TN % 256 == 0:
        return TB, TN // 2
    return TB, TN


def _vmem_limit(block_bytes):
    # 2x for double-buffering of every operand + headroom; cap below v7x's
    # 64 MiB physical VMEM so the compiler never over-commits.
    est = 2 * block_bytes + (4 << 20)
    return int(min(48 << 20, max(est, 16 << 20)))


# ----------------------------- wrappers ------------------------------------ #

def mask_generator_uncond(x, mask_param, *, tile_bytes=_DEFAULT_TILE_BYTES,
                          donate_x=False):
    """x: (B, N), mask_param: (N,) -> (B, N)."""
    B, N = x.shape
    TN = _pick_feature_tile(N)
    TB = _pick_batch_tile(B, TN, x.dtype, tile_bytes)
    TB, TN = _maybe_split_for_megacore(B, TB, N, TN, x.dtype)
    mask2d = mask_param.reshape(1, N)

    itemsize = jnp.dtype(x.dtype).itemsize
    block_bytes = (2 * TB * TN * itemsize                       # x + out
                   + TN * jnp.dtype(mask_param.dtype).itemsize)  # mask slice

    return pl.pallas_call(
        _mask_uncond_kernel,
        out_shape=jax.ShapeDtypeStruct((B, N), x.dtype),
        grid=(pl.cdiv(B, TB), pl.cdiv(N, TN)),
        in_specs=[
            pl.BlockSpec((TB, TN), lambda i, j: (i, j)),   # x, 2-D tiled
            pl.BlockSpec((1, TN), lambda i, j: (0, j)),    # mask param slice
        ],
        out_specs=pl.BlockSpec((TB, TN), lambda i, j: (i, j)),
        input_output_aliases=({0: 0} if donate_x else {}),
        compiler_params=pltpu.CompilerParams(
            dimension_semantics=("parallel", "parallel"),
            vmem_limit_bytes=_vmem_limit(block_bytes)),
    )(x, mask2d)


def mask_generator_cond(x, cond, weight_t, bias, *,
                        tile_bytes=_DEFAULT_TILE_BYTES, donate_x=False):
    """x: (B, N), cond: (B, C), weight_t: (C, N) [pre-transposed], bias: (N,) -> (B, N)."""
    B, N = x.shape
    C = cond.shape[1]
    TN = _pick_feature_tile(N)
    TB = _pick_batch_tile(B, TN, x.dtype, tile_bytes)
    TB, TN = _maybe_split_for_megacore(B, TB, N, TN, x.dtype)
    b2d = bias.reshape(1, N)

    isz_x = jnp.dtype(x.dtype).itemsize
    isz_c = jnp.dtype(cond.dtype).itemsize
    isz_w = jnp.dtype(weight_t.dtype).itemsize
    block_bytes = (2 * TB * TN * isz_x        # x + out
                   + TB * C * isz_c           # cond
                   + C * TN * isz_w           # W^T slice
                   + TN * jnp.dtype(bias.dtype).itemsize)

    return pl.pallas_call(
        _mask_cond_kernel,
        out_shape=jax.ShapeDtypeStruct((B, N), x.dtype),
        grid=(pl.cdiv(B, TB), pl.cdiv(N, TN)),
        in_specs=[
            pl.BlockSpec((TB, TN), lambda i, j: (i, j)),   # x, 2-D tiled
            pl.BlockSpec((TB, C), lambda i, j: (i, 0)),    # cond, batch-tiled
            pl.BlockSpec((C, TN), lambda i, j: (0, j)),    # W^T, feature-tiled
            pl.BlockSpec((1, TN), lambda i, j: (0, j)),    # bias, feature-tiled
        ],
        out_specs=pl.BlockSpec((TB, TN), lambda i, j: (i, j)),
        input_output_aliases=({0: 0} if donate_x else {}),
        compiler_params=pltpu.CompilerParams(
            dimension_semantics=("parallel", "parallel"),
            vmem_limit_bytes=_vmem_limit(block_bytes)),
    )(x, cond, weight_t, b2d)


# ----------------------------- main ----------------------------------------- #

if __name__ == "__main__":
    key = jax.random.PRNGKey(0)
    k_x, k_cond, k_mask, k_w, k_b = jax.random.split(key, 5)

    B, num_inputs, num_cond = 8, 128, 32

    x = jax.random.normal(k_x, (B, num_inputs), dtype=jnp.float32)
    cond = jax.random.normal(k_cond, (B, num_cond), dtype=jnp.float32)

    # --- unconditional parameters: mask = 2 * rand(num_inputs) - 1 ---
    mask_param = 2.0 * jax.random.uniform(k_mask, (num_inputs,), dtype=jnp.float32) - 1.0

    # --- conditional parameters: nn.Linear(num_cond, num_inputs) default init ---
    bound = 1.0 / math.sqrt(num_cond)
    weight = jax.random.uniform(k_w, (num_inputs, num_cond), dtype=jnp.float32,
                                minval=-bound, maxval=bound)
    bias = jax.random.uniform(k_b, (num_inputs,), dtype=jnp.float32,
                              minval=-bound, maxval=bound)
    # Pre-transpose ONCE at parameter-prep time (not per call).
    weight_t = jnp.asarray(weight.T)   # (num_cond, num_inputs)

    # Run both forward variants through the Pallas kernels.
    out_uncond = jax.block_until_ready(mask_generator_uncond(x, mask_param))
    out_cond = jax.block_until_ready(mask_generator_cond(x, cond, weight_t, bias))

    # Pure-JAX reference check (same semantics as the PyTorch forward).
    ref_uncond = x * jnp.round(jax.nn.sigmoid(mask_param))[None, :]
    ref_cond = x * jnp.round(jax.nn.sigmoid(cond @ weight.T + bias))
    assert jnp.allclose(out_uncond, ref_uncond, atol=1e-5, rtol=1e-5)
    assert jnp.allclose(out_cond, ref_cond, atol=1e-5, rtol=1e-5)

    print("KERNEL_OK")
</pallas_src>

<mosaic_0001>
module attributes {stable_mosaic.version = 11 : i64} {
  func.func @_mask_uncond_kernel(%arg0: i32, %arg1: i32, %arg2: memref<8x128xf32, #tpu.memory_space<vmem>>, %arg3: memref<1x128xf32, #tpu.memory_space<vmem>>, %arg4: memref<8x128xf32, #tpu.memory_space<vmem>>) attributes {dimension_semantics = [#tpu.dimension_semantics<parallel>, #tpu.dimension_semantics<parallel>], iteration_bounds = array<i64: 1, 1>, scalar_prefetch = 0 : i64, scratch_operands = 0 : i64, tpu.core_type = #tpu.core_type<tc>, window_params = [{transform_indices = @transform_0, window_bounds = array<i64: 8, 128>}, {transform_indices = @transform_1, window_bounds = array<i64: 1, 128>}, {transform_indices = @transform_2, window_bounds = array<i64: 8, 128>}]} {
    %c0 = arith.constant 0 : index
    %c0_0 = arith.constant 0 : index
    %0 = vector.load %arg3[%c0, %c0_0] : memref<1x128xf32, #tpu.memory_space<vmem>>, vector<1x128xf32>
    %cst = arith.constant 0.000000e+00 : f32
    %1 = vector.broadcast %cst : f32 to vector<1x128xf32>
    %2 = arith.cmpf ogt, %0, %1 : vector<1x128xf32>
    %cst_1 = arith.constant 1.000000e+00 : f32
    %cst_2 = arith.constant 0.000000e+00 : f32
    %3 = vector.broadcast %cst_1 : f32 to vector<1x128xf32>
    %4 = vector.broadcast %cst_2 : f32 to vector<1x128xf32>
    %5 = arith.select %2, %3, %4 : vector<1x128xi1>, vector<1x128xf32>
    %c0_3 = arith.constant 0 : index
    %c0_4 = arith.constant 0 : index
    %6 = vector.load %arg2[%c0_3, %c0_4] : memref<8x128xf32, #tpu.memory_space<vmem>>, vector<8x128xf32>
    %7 = vector.broadcast %5 : vector<1x128xf32> to vector<8x128xf32>
    %8 = arith.mulf %6, %7 : vector<8x128xf32>
    %c0_5 = arith.constant 0 : index
    %c0_6 = arith.constant 0 : index
    %9 = vector.load %arg4[%c0_5, %c0_6] : memref<8x128xf32, #tpu.memory_space<vmem>>, vector<8x128xf32>
    tpu.vector_store %arg4[%c0_5, %c0_6], %8 {strides = array<i32>} : memref<8x128xf32, #tpu.memory_space<vmem>>, vector<8x128xf32>,
    return
  }
  func.func @transform_0(%arg0: i32, %arg1: i32) -> (i32, i32) {
    %c0_i32 = arith.constant 0 : i32
    return %arg0, %arg1 : i32, i32
  }
  func.func @transform_1(%arg0: i32, %arg1: i32) -> (i32, i32) {
    %c0_i32 = arith.constant 0 : i32
    %c0_i32_0 = arith.constant 0 : i32
    return %c0_i32, %arg1 : i32, i32
  }
  func.func @transform_2(%arg0: i32, %arg1: i32) -> (i32, i32) {
    %c0_i32 = arith.constant 0 : i32
    return %arg0, %arg1 : i32, i32
  }
}

</mosaic_0001>

<llo_original>
// kernel: tpu_custom_call.1
$region0: #{tpu_custom_call.1}
  #allocation0 [shape = 'u32[]', space=smem, size = 0x4, offset = 0x4, fixed_abs, tag = 'smem constant byte address 0x4 - core index']
  #allocation1 [shape = 'u32[144,128]{1,0:T(1,128)}', space=vmem, size = 0x12000, scoped, tag = 'internal scratch']
  %s0 = inlined_call_operand.hbm [shape: f32[8,128], index: 0, kind: input, shape index: {}]
  %s1 = inlined_call_operand.vmem [shape: f32[1,128], index: 1, kind: input, shape index: {}]
  %s2 = inlined_call_operand.hbm [shape: f32[8,128], index: 2, kind: output, shape index: {}]
  %s3 = sld [smem:[#allocation0]]
  $region22: #{tpu_custom_call.1} parent=0
    _
  %s5 = ssub.s32 1, %s3
  %s6 = scalar_select 0, %s5, %s3
  $region1: #{tpu_custom_call.1} parent=0
    #allocation2 [shape = 'u8[4096]{0}', space=vmem, size = 0x1000, scoped, tag = 'input window, operand 0, single buffered']
    #allocation3 [shape = 's32[1]{0}', space=sflag, size = 0x4, scoped, tag = 'scoped memory for tpu_custom_call.1']
    #allocation4 [shape = 's32[1]{0}', space=sflag, size = 0x4, scoped, tag = 'scoped memory for tpu_custom_call.1']
    #allocation5 [shape = 'u8[4096]{0}', space=vmem, size = 0x1000, scoped, tag = 'output window, operand 0, single buffered']
    %7 = vsyncpa [#allocation3], 0
    %8 = vsyncpa [#allocation4], 0
    // Predicated region
    $region2: #{tpu_custom_call.1} parent=1 // pred_check
      _
    $region3: #{tpu_custom_call.1} parent=1 // pred_check_branch
      %10 = sbr.rel (0) target = $region5
    $region4: #{tpu_custom_call.1} parent=1 // pred_region
      %s12 = ssub.s32 128, 128
      %13 = vsyncadd [#allocation3], %s12
      %s15 = sshll.u32 [#allocation2], 4
      %s16 = int_to_ptr.vmem [resolvable:$true] %s15
      %18 = dma.hbm_to_vmem [thread:$0]  %s0, 128, %s16, [#allocation3]
    $region5: #{tpu_custom_call.1} parent=1 // pred_fallthru
      _
    // Predicated region
    $region6: #{tpu_custom_call.1} parent=1 // pred_check
      _
    $region7: #{tpu_custom_call.1} parent=1 // pred_check_branch
      %20 = sbr.rel (0) target = $region9
    $region8: #{tpu_custom_call.1} parent=1 // pred_region
      _
    $region9: #{tpu_custom_call.1} parent=1 // pred_fallthru
      _
    // Predicated region
    $region10: #{tpu_custom_call.1} parent=1 // pred_check
      _
    $region11: #{tpu_custom_call.1} parent=1 // pred_check_branch
      %22 = sbr.rel (0) target = $region13
    $region12: #{tpu_custom_call.1} parent=1 // pred_region
      %23 = dma.done [#allocation3], 128
    $region13: #{tpu_custom_call.1} parent=1 // pred_fallthru
      _
    %v24 = vld [vmem:[%s1] sm:$0x1]
    %vm25 = vcmp.gt.f32.partialorder %v24, 0.0
    %v26 = vsel %vm25, 1.0, 0.0
    %v27 = vld [vmem:[#allocation2] sm:$0xff]
    %v29 = vlaneseq
    %v30 = vshrl.u32 %v29, 7
    %v31 = vsub.s32 0, %v30
    %v32 = vrot.slane %v26, %v31
    %v34 = vmul.f32 %v27, %v32
    %35 = vst [vmem:[#allocation5] sm:$0xff] %v34
    // Predicated region
    $region14: #{tpu_custom_call.1} parent=1 // pred_check
      _
    $region15: #{tpu_custom_call.1} parent=1 // pred_check_branch
      %37 = sbr.rel (0) target = $region17
    $region16: #{tpu_custom_call.1} parent=1 // pred_region
      %s39 = ssub.s32 128, 128
      %40 = vsyncadd [#allocation4], %s39
      %s42 = sshll.u32 [#allocation5], 4
      %s43 = int_to_ptr.vmem [resolvable:$true] %s42
      %45 = dma.vmem_to_hbm [thread:$0]  %s43, 128, %s2, [#allocation4]
    $region17: #{tpu_custom_call.1} parent=1 // pred_fallthru
      _
    // Predicated region
    $region18: #{tpu_custom_call.1} parent=1 // pred_check
      _
    $region19: #{tpu_custom_call.1} parent=1 // pred_check_branch
      %47 = sbr.rel (0) target = $region21
    $region20: #{tpu_custom_call.1} parent=1 // pred_region
      %48 = dma.done [#allocation4], 128
    $region21: #{tpu_custom_call.1} parent=1 // pred_fallthru
      _
    %49 = vsyncpa [#allocation3], 1
    %50 = vsyncpa [#allocation4], 1

</llo_original>
